<compile_context>
chip_gen: v5e
topology: v5e:2x2
jax: 0.10.0
libtpu: 0.0.40
codegen_flags: <defaults>
</compile_context>

<pallas_src>
import math

import jax
import jax.numpy as jnp
from jax.experimental import pallas as pl
from jax.experimental.pallas import tpu as pltpu


# ---------------------------------------------------------------------------
# Kernel
# ---------------------------------------------------------------------------

def _add_row_bias_kernel(x_ref, b_ref, o_ref):
    # x_ref: (TM, TN), b_ref: (1, TN) -> broadcast add over rows of the tile.
    o_ref[...] = x_ref[...] + b_ref[...]


# ---------------------------------------------------------------------------
# Tiling configuration
# ---------------------------------------------------------------------------

_TM_TARGET = 1024          # rows per tile   (sublane axis, multiple of 8)
_TN_TARGET = 1024          # lanes per tile  (lane axis,   multiple of 128)
_MIN_GRID_STEPS = 4        # give v7x's 2 TCs work + room for DMA pipelining
_XLA_FALLBACK_BYTES = 2 << 20   # below this, pallas_call overhead dominates


def _round_up(x, m):
    return ((x + m - 1) // m) * m


def _tile_size(dim, target, align):
    """Largest legal block size <= target for an axis of length `dim`."""
    if dim <= target:
        return dim                        # full extent is always a legal block
    return max(align, (target // align) * align)


def _fold_factor(n, d):
    """k such that n % k == 0, (k*d) % 128 == 0, aiming for ~1024 lanes."""
    if d >= 128 or n <= 1:
        return 1
    base = 128 // math.gcd(d, 128)
    if n % base != 0:
        return 1
    k = base
    while k * d < 1024 and n % (k * 2) == 0:
        k *= 2
    return k


# ---------------------------------------------------------------------------
# Tiled pallas_call wrapper for the "x + row_bias" pattern
# ---------------------------------------------------------------------------

def _add_row_bias(x2d, bias_row, *, force_pallas=False):
    """x2d: (N, D), bias_row: (1, D) -> x2d + bias_row (broadcast over rows)."""
    orig_n, orig_d = x2d.shape
    itemsize = jnp.dtype(x2d.dtype).itemsize

    # Tiny inputs: the fused XLA broadcast-add is strictly faster than a
    # pallas_call launch + pipeline setup.
    if not force_pallas and orig_n * orig_d * itemsize < _XLA_FALLBACK_BYTES:
        return x2d + bias_row

    # Lane-fold small-D inputs so stores are full 128-lane wide.
    n, d = orig_n, orig_d
    k = _fold_factor(n, d)
    if k > 1:
        x2d = x2d.reshape(n // k, k * d)          # contiguous reshape, no copy
        bias_row = jnp.tile(bias_row, (1, k))
        n, d = x2d.shape

    tm = _tile_size(n, _TM_TARGET, 8)
    tn = _tile_size(d, _TN_TARGET, 128)

    # If everything fits in one or two tiles but the array is non-trivial,
    # split the row axis so both v7x TensorCores get work and the pipeline
    # can overlap writeback with the next fetch.
    steps = pl.cdiv(n, tm) * pl.cdiv(d, tn)
    if steps < _MIN_GRID_STEPS and n >= 8 * _MIN_GRID_STEPS:
        tm = max(8, _round_up(pl.cdiv(n, _MIN_GRID_STEPS), 8))

    # Grid: lane-tile axis outer, row-tile axis inner -> the bias tile's block
    # index is constant over the inner loop, so it stays resident in VMEM.
    grid = (pl.cdiv(d, tn), pl.cdiv(n, tm))

    # Double-buffered x + out tiles + double-buffered bias row, plus headroom.
    footprint = (2 * 2 * tm * tn + 2 * tn) * itemsize
    vmem_limit = int(min(max(footprint + (8 << 20), 16 << 20), 48 << 20))

    cost = pl.CostEstimate(
        flops=n * d,
        transcendentals=0,
        bytes_accessed=(2 * n * d + d) * itemsize,
    )

    out = pl.pallas_call(
        _add_row_bias_kernel,
        out_shape=jax.ShapeDtypeStruct((n, d), x2d.dtype),
        grid=grid,
        in_specs=[
            pl.BlockSpec((tm, tn), lambda j, i: (i, j)),   # x tile
            pl.BlockSpec((1, tn), lambda j, i: (0, j)),    # bias tile (resident per j)
        ],
        out_specs=pl.BlockSpec((tm, tn), lambda j, i: (i, j)),
        compiler_params=pltpu.CompilerParams(
            dimension_semantics=("parallel", "parallel"),
            vmem_limit_bytes=vmem_limit,
        ),
        cost_estimate=cost,
    )(x2d, bias_row)

    if k > 1:
        out = out.reshape(orig_n, orig_d)
    return out


# ---------------------------------------------------------------------------
# Wrapper (mirrors AddBias.forward)
# ---------------------------------------------------------------------------

def add_bias(x, bias_param, *, force_pallas=False):
    """bias_param has shape (D, 1), matching nn.Parameter(bias.unsqueeze(1))."""
    # Match PyTorch dtype promotion: x + bias promotes (e.g. bf16 + f32 -> f32).
    out_dtype = jnp.result_type(x.dtype, bias_param.dtype)
    bias_flat = bias_param.reshape(-1).astype(out_dtype)   # (D,) / (C,)
    x = x.astype(out_dtype)

    if x.ndim == 2:
        n, d = x.shape
        assert bias_flat.shape[0] == d
        bias_row = bias_flat.reshape(1, d)
        return _add_row_bias(x, bias_row, force_pallas=force_pallas)

    elif x.ndim == 4:
        n, c, h, w = x.shape
        assert bias_flat.shape[0] == c
        # Collapse C,H,W into the lane axis (contiguous reshape -> no copy) so
        # loads/stores are full 128-lane wide instead of W-wide masked stores.
        # TODO(synk): cache bias_row per parameter if called outside jit;
        # under jit the repeat is constant-folded/fused.
        x2d = x.reshape(n, c * h * w)
        bias_row = jnp.repeat(bias_flat, h * w).reshape(1, c * h * w)
        out2d = _add_row_bias(x2d, bias_row, force_pallas=force_pallas)
        return out2d.reshape(n, c, h, w)

    else:
        raise ValueError(f"AddBias expects 2-D or 4-D input, got ndim={x.ndim}")


# ---------------------------------------------------------------------------
# Main
# ---------------------------------------------------------------------------

if __name__ == "__main__":
    key = jax.random.PRNGKey(0)
    k1, k2, k3, k4 = jax.random.split(key, 4)

    # ---- 4-D case: x (N=2, C=4, H=16, W=16), bias param (C, 1) ----
    x4 = jax.random.normal(k1, (2, 4, 16, 16), dtype=jnp.float32)
    bias4 = jax.random.normal(k2, (4,), dtype=jnp.float32)[:, None]  # (C, 1)

    ref4 = x4 + bias4.T.reshape(1, -1, 1, 1)
    out4 = jax.block_until_ready(add_bias(x4, bias4, force_pallas=True))
    assert jnp.allclose(out4, ref4, atol=1e-6), "4-D AddBias (pallas) mismatch"
    out4_auto = jax.block_until_ready(add_bias(x4, bias4))   # auto path (XLA fallback here)
    assert jnp.allclose(out4_auto, ref4, atol=1e-6), "4-D AddBias (auto) mismatch"

    # ---- 2-D case: x (N=8, D=32), bias param (D, 1) ----
    x2 = jax.random.normal(k3, (8, 32), dtype=jnp.float32)
    bias2 = jax.random.normal(k4, (32,), dtype=jnp.float32)[:, None]  # (D, 1)

    ref2 = x2 + bias2.T.reshape(1, -1)
    out2 = jax.block_until_ready(add_bias(x2, bias2, force_pallas=True))
    assert jnp.allclose(out2, ref2, atol=1e-6), "2-D AddBias (pallas) mismatch"
    out2_auto = jax.block_until_ready(add_bias(x2, bias2))
    assert jnp.allclose(out2_auto, ref2, atol=1e-6), "2-D AddBias (auto) mismatch"

    # ---- dtype-promotion check: bf16 x + f32 bias -> f32 out (like torch) ----
    x2_bf16 = x2.astype(jnp.bfloat16)
    out_mix = jax.block_until_ready(add_bias(x2_bf16, bias2, force_pallas=True))
    assert out_mix.dtype == jnp.float32, "dtype promotion mismatch"
    ref_mix = x2_bf16.astype(jnp.float32) + bias2.T.reshape(1, -1)
    assert jnp.allclose(out_mix, ref_mix, atol=1e-2), "mixed-dtype AddBias mismatch"

    print("KERNEL_OK")
</pallas_src>

<mosaic_0001>
module attributes {stable_mosaic.version = 11 : i64} {
  func.func @_add_row_bias_kernel(%arg0: i32, %arg1: i32, %arg2: memref<2x1024xf32, #tpu.memory_space<vmem>>, %arg3: memref<1x1024xf32, #tpu.memory_space<vmem>>, %arg4: memref<2x1024xf32, #tpu.memory_space<vmem>>) attributes {dimension_semantics = [#tpu.dimension_semantics<parallel>, #tpu.dimension_semantics<parallel>], iteration_bounds = array<i64: 1, 1>, scalar_prefetch = 0 : i64, scratch_operands = 0 : i64, tpu.core_type = #tpu.core_type<tc>, window_params = [{transform_indices = @transform_0, window_bounds = array<i64: 2, 1024>}, {transform_indices = @transform_1, window_bounds = array<i64: 1, 1024>}, {transform_indices = @transform_2, window_bounds = array<i64: 2, 1024>}]} {
    %c0 = arith.constant 0 : index
    %c0_0 = arith.constant 0 : index
    %0 = vector.load %arg2[%c0, %c0_0] : memref<2x1024xf32, #tpu.memory_space<vmem>>, vector<2x1024xf32>
    %c0_1 = arith.constant 0 : index
    %c0_2 = arith.constant 0 : index
    %1 = vector.load %arg3[%c0_1, %c0_2] : memref<1x1024xf32, #tpu.memory_space<vmem>>, vector<1x1024xf32>
    %2 = vector.broadcast %1 : vector<1x1024xf32> to vector<2x1024xf32>
    %3 = arith.addf %0, %2 : vector<2x1024xf32>
    %c0_3 = arith.constant 0 : index
    %c0_4 = arith.constant 0 : index
    %4 = vector.load %arg4[%c0_3, %c0_4] : memref<2x1024xf32, #tpu.memory_space<vmem>>, vector<2x1024xf32>
    tpu.vector_store %arg4[%c0_3, %c0_4], %3 {strides = array<i32>} : memref<2x1024xf32, #tpu.memory_space<vmem>>, vector<2x1024xf32>,
    return
  }
  func.func @transform_0(%arg0: i32, %arg1: i32) -> (i32, i32) {
    %c0_i32 = arith.constant 0 : i32
    return %arg1, %arg0 : i32, i32
  }
  func.func @transform_1(%arg0: i32, %arg1: i32) -> (i32, i32) {
    %c0_i32 = arith.constant 0 : i32
    %c0_i32_0 = arith.constant 0 : i32
    return %c0_i32, %arg0 : i32, i32
  }
  func.func @transform_2(%arg0: i32, %arg1: i32) -> (i32, i32) {
    %c0_i32 = arith.constant 0 : i32
    return %arg1, %arg0 : i32, i32
  }
}

</mosaic_0001>

<llo_original>
// kernel: tpu_custom_call.1
$region0: #{tpu_custom_call.1}
  #allocation0 [shape = 'u32[]', space=smem, size = 0x4, offset = 0x4, fixed_abs, tag = 'smem constant byte address 0x4 - core index']
  #allocation1 [shape = 'u32[72,128]{1,0:T(1,128)}', space=vmem, size = 0x9000, scoped, tag = 'internal scratch']
  %s0 = inlined_call_operand.hbm [shape: f32[2,1024], index: 0, kind: input, shape index: {}]
  %s1 = inlined_call_operand.hbm [shape: f32[1,1024], index: 1, kind: input, shape index: {}]
  %s2 = inlined_call_operand.hbm [shape: f32[2,1024], index: 2, kind: output, shape index: {}]
  %s3 = sld [smem:[#allocation0]]
  $region26: #{tpu_custom_call.1} parent=0
    _
  %s5 = ssub.s32 1, %s3
  %s6 = scalar_select 0, %s5, %s3
  $region1: #{tpu_custom_call.1} parent=0
    #allocation2 [shape = 'u8[8192]{0}', space=vmem, size = 0x2000, scoped, tag = 'input window, operand 0, single buffered']
    #allocation3 [shape = 's32[1]{0}', space=sflag, size = 0x4, scoped, tag = 'scoped memory for tpu_custom_call.1']
    #allocation4 [shape = 's32[1]{0}', space=sflag, size = 0x4, scoped, tag = 'scoped memory for tpu_custom_call.1']
    #allocation5 [shape = 'u8[4096]{0}', space=vmem, size = 0x1000, scoped, tag = 'input window, operand 1, single buffered']
    #allocation6 [shape = 's32[1]{0}', space=sflag, size = 0x4, scoped, tag = 'scoped memory for tpu_custom_call.1']
    #allocation7 [shape = 'u8[8192]{0}', space=vmem, size = 0x2000, scoped, tag = 'output window, operand 0, single buffered']
    %7 = vsyncpa [#allocation3], 0
    %8 = vsyncpa [#allocation6], 0
    %9 = vsyncpa [#allocation4], 0
    // Predicated region
    $region2: #{tpu_custom_call.1} parent=1 // pred_check
      _
    $region3: #{tpu_custom_call.1} parent=1 // pred_check_branch
      %11 = sbr.rel (0) target = $region5
    $region4: #{tpu_custom_call.1} parent=1 // pred_region
      %13 = vsyncadd [#allocation3], 0
      %s15 = sshll.u32 %s0, 4
      %s16 = int_to_ptr.hbm [resolvable:$true] %s15
      %s17 = sshll.u32 [#allocation2], 4
      %s18 = int_to_ptr.vmem [resolvable:$true] %s17
      %20 = dma.hbm_to_vmem [thread:$0]  %s16, 256, %s18, [#allocation3]
    $region5: #{tpu_custom_call.1} parent=1 // pred_fallthru
      _
    // Predicated region
    $region6: #{tpu_custom_call.1} parent=1 // pred_check
      _
    $region7: #{tpu_custom_call.1} parent=1 // pred_check_branch
      %22 = sbr.rel (0) target = $region9
    $region8: #{tpu_custom_call.1} parent=1 // pred_region
      %24 = vsyncadd [#allocation6], 0
      %s26 = sshll.u32 %s1, 4
      %s27 = int_to_ptr.hbm [resolvable:$true] %s26
      %s28 = sshll.u32 [#allocation5], 4
      %s29 = int_to_ptr.vmem [resolvable:$true] %s28
      %31 = dma.hbm_to_vmem [thread:$0]  %s27, 128, %s29, [#allocation6]
    $region9: #{tpu_custom_call.1} parent=1 // pred_fallthru
      _
    // Predicated region
    $region10: #{tpu_custom_call.1} parent=1 // pred_check
      _
    $region11: #{tpu_custom_call.1} parent=1 // pred_check_branch
      %33 = sbr.rel (0) target = $region13
    $region12: #{tpu_custom_call.1} parent=1 // pred_region
      %35 = dma.done [#allocation3], 256
    $region13: #{tpu_custom_call.1} parent=1 // pred_fallthru
      _
    // Predicated region
    $region14: #{tpu_custom_call.1} parent=1 // pred_check
      _
    $region15: #{tpu_custom_call.1} parent=1 // pred_check_branch
      %37 = sbr.rel (0) target = $region17
    $region16: #{tpu_custom_call.1} parent=1 // pred_region
      %39 = dma.done [#allocation6], 128
    $region17: #{tpu_custom_call.1} parent=1 // pred_fallthru
      _
    %v40 = vld [vmem:[#allocation2] sm:$0xff]
    %v41 = vld [vmem:[#allocation2 + $0x8] sm:$0xff]
    %v42 = vld [vmem:[#allocation5] sm:$0xff]
    %v44 = vperm.slane %v42, 0
    %v45 = vperm.slane %v42, 1
    %v46 = vperm.slane %v42, 2
    %v47 = vperm.slane %v42, 3
    %v48 = vperm.slane %v42, 4
    %v49 = vperm.slane %v42, 5
    %v50 = vperm.slane %v42, 6
    %v51 = vperm.slane %v42, 7
    %v52 = vrot.slane %v45, 6
    %v53 = vrot.slane %v46, 4
    %v54 = vrot.slane %v47, 2
    %v55 = vrot.slane %v49, 6
    %v56 = vrot.slane %v50, 4
    %v57 = vrot.slane %v51, 2
    %vm58 = vcmask 1041408
    %v59 = vsel %vm58, %v44, %v52
    %vm60 = vcmask 1045508
    %v61 = vsel %vm60, %v53, %v54
    %vm62 = vcmask 1043456
    %v63 = vsel %vm62, %v59, %v61
    %v64 = vsel %vm58, %v48, %v55
    %v65 = vsel %vm60, %v56, %v57
    %v66 = vsel %vm62, %v64, %v65
    %v69 = vadd.f32 %v40, %v63
    %v70 = vadd.f32 %v41, %v66
    %71 = vst [vmem:[#allocation7] sm:$0xff] %v69
    %72 = vst [vmem:[#allocation7 + $0x8] sm:$0xff] %v70
    // Predicated region
    $region18: #{tpu_custom_call.1} parent=1 // pred_check
      _
    $region19: #{tpu_custom_call.1} parent=1 // pred_check_branch
      %74 = sbr.rel (0) target = $region21
    $region20: #{tpu_custom_call.1} parent=1 // pred_region
      %76 = vsyncadd [#allocation4], 0
      %s78 = sshll.u32 [#allocation7], 4
      %s79 = int_to_ptr.vmem [resolvable:$true] %s78
      %s80 = sshll.u32 %s2, 4
      %s81 = int_to_ptr.hbm [resolvable:$true] %s80
      %83 = dma.vmem_to_hbm [thread:$0]  %s79, 256, %s81, [#allocation4]
    $region21: #{tpu_custom_call.1} parent=1 // pred_fallthru
      _
    // Predicated region
    $region22: #{tpu_custom_call.1} parent=1 // pred_check
      _
    $region23: #{tpu_custom_call.1} parent=1 // pred_check_branch
      %85 = sbr.rel (0) target = $region25
    $region24: #{tpu_custom_call.1} parent=1 // pred_region
      %87 = dma.done [#allocation4], 256
    $region25: #{tpu_custom_call.1} parent=1 // pred_fallthru
      _
    %88 = vsyncpa [#allocation3], 1
    %89 = vsyncpa [#allocation6], 1
    %90 = vsyncpa [#allocation4], 1

</llo_original>
